<compile_context>
chip_gen: v7x
topology: tpu7x:2x2x1
jax: 0.10.0
libtpu: 0.0.40
codegen_flags: <defaults>
</compile_context>

<pallas_src>
import functools

import jax
import jax.numpy as jnp
from jax import lax
from jax.experimental import pallas as pl
from jax.experimental.pallas import tpu as pltpu


def axiom_evolver_kernel(x_ref, w1_ref, b1_ref, w2_ref, b2_ref, w3_ref, b3_ref,
                         out_ref, *, precision=None):
    xT = x_ref[...]                                            # (2, Bt) batch on lanes

    # Layer 1: Linear(2,16) + tanh.  K=2 matmul on the (otherwise idle) MXU.
    h1 = jnp.tanh(
        jnp.dot(w1_ref[...], xT,
                preferred_element_type=jnp.float32,
                precision=precision)
        + b1_ref[...])                                         # (16, Bt)

    # Layer 2: Linear(16,16) + sin (sin is a VALU polynomial -> binding slot).
    h2 = jnp.sin(
        jnp.dot(w2_ref[...], h1,
                preferred_element_type=jnp.float32,
                precision=precision)
        + b2_ref[...])                                         # (16, Bt)

    # Layer 3: Linear(16,1) + sigmoid*2  ==  1 + tanh(z/2)  (single EUP op).
    z3 = jnp.dot(w3_ref[...], h2,
                 preferred_element_type=jnp.float32,
                 precision=precision) + b3_ref[0, 0]           # (1, Bt)
    out_ref[...] = (1.0 + jnp.tanh(0.5 * z3)).astype(out_ref.dtype)


def _cdiv(a, b):
    return -(-a // b)


def _round_up(n, m):
    return _cdiv(n, m) * m


def axiom_evolver(x, w1, b1, w2, b2, w3, b3, *, btile=32768, precision=None):
    """x: (B, 2). Weights in PyTorch layout: w1 (16,2), w2 (16,16), w3 (1,16).

    `precision=None` uses the backend-default (single-pass) MXU matmul; pass
    lax.Precision.HIGHEST for exact-f32 Linear semantics.
    """
    B = x.shape[0]
    # Lane-aligned batch tile; for large B keep >=8 grid steps so the
    # ("parallel",) batch axis can shard across v7x's two TensorCores.
    bt = min(btile, _round_up(_cdiv(B, 8), 128))
    Bp = _round_up(B, bt)                     # padded batch (one-tile multiple)

    # Transpose to batch-on-lanes; the tiny pad fuses into the same XLA pass.
    xT = jnp.pad(x.T.astype(jnp.float32), ((0, 0), (0, Bp - B)))
    b1c = b1.reshape(16, 1).astype(jnp.float32)
    b2c = b2.reshape(16, 1).astype(jnp.float32)
    b3s = b3.reshape(1, 1).astype(jnp.float32)

    const = lambda shape: pl.BlockSpec(shape, lambda i: (0, 0))

    outT = pl.pallas_call(
        functools.partial(axiom_evolver_kernel, precision=precision),
        out_shape=jax.ShapeDtypeStruct((1, Bp), jnp.float32),
        grid=(Bp // bt,),
        in_specs=[
            pl.BlockSpec((2, bt), lambda i: (0, i)),              # xT tile
            const((16, 2)),                                       # w1 (resident)
            const((16, 1)),                                       # b1
            const((16, 16)),                                      # w2
            const((16, 1)),                                       # b2
            const((1, 16)),                                       # w3
            pl.BlockSpec(memory_space=pltpu.MemorySpace.SMEM),    # b3 scalar
        ],
        out_specs=pl.BlockSpec((1, bt), lambda i: (0, i)),        # lane-dense out
        compiler_params=pltpu.CompilerParams(
            dimension_semantics=("parallel",),
            vmem_limit_bytes=32 * 1024 * 1024),
        cost_estimate=pl.CostEstimate(
            flops=608 * Bp,            # 2*(2*16 + 16*16 + 16*1) per sample
            transcendentals=33 * Bp,   # 16 tanh + 16 sin + 1 tanh per sample
            bytes_accessed=12 * Bp),   # 8 B read + 4 B written per sample
    )(xT, w1.astype(jnp.float32), b1c, w2.astype(jnp.float32), b2c,
      w3.astype(jnp.float32), b3s)

    return outT[0, :B].reshape(B, 1)


def init_params(key):
    """Deterministic init mimicking nn.Linear's uniform(-1/sqrt(fan_in), +...).

    Weights stay in PyTorch's native (out_features, in_features) layout.
    """
    def linear(key, fan_in, fan_out):
        kw, kb = jax.random.split(key)
        bound = 1.0 / jnp.sqrt(fan_in)
        w = jax.random.uniform(kw, (fan_out, fan_in), jnp.float32, -bound, bound)
        b = jax.random.uniform(kb, (fan_out,), jnp.float32, -bound, bound)
        return w, b

    k1, k2, k3 = jax.random.split(key, 3)
    w1, b1 = linear(k1, 2, 16)
    w2, b2 = linear(k2, 16, 16)
    w3, b3 = linear(k3, 16, 1)
    return w1, b1, w2, b2, w3, b3


def reference(x, w1, b1, w2, b2, w3, b3, precision=None):
    h = jnp.tanh(jnp.dot(x, w1.T, precision=precision) + b1)
    h = jnp.sin(jnp.dot(h, w2.T, precision=precision) + b2)
    return jax.nn.sigmoid(jnp.dot(h, w3.T, precision=precision) + b3) * 2.0


if __name__ == "__main__":
    key = jax.random.PRNGKey(0)
    kx, kp = jax.random.split(key)

    params = init_params(kp)

    # --- small batch (single grid step), default (fast) precision path -------
    B = 8
    x = jax.random.normal(kx, (B, 2), jnp.float32)
    fn = jax.jit(axiom_evolver)
    out = jax.block_until_ready(fn(x, *params))
    assert out.shape == (B, 1)
    assert bool(jnp.all(jnp.isfinite(out)))
    assert bool(jnp.all((out >= 0.0) & (out <= 2.0)))
    # Both sides use backend-default matmul precision; the tolerance covers the
    # bf16 input rounding of TPU default-precision MXU passes.
    ref = reference(x, *params)
    assert jnp.allclose(out, ref, atol=2e-2, rtol=0.0), (out, ref)

    # --- larger batch: exercises the grid / padded tail --------------------
    B2 = 1000
    x2 = jax.random.normal(jax.random.PRNGKey(1), (B2, 2), jnp.float32)
    out2 = jax.block_until_ready(fn(x2, *params))
    ref2 = reference(x2, *params)
    assert out2.shape == (B2, 1)
    assert jnp.allclose(out2, ref2, atol=2e-2, rtol=0.0)

    # --- strict check: matched HIGHEST precision on both sides --------------
    hi = lax.Precision.HIGHEST
    out_hi = jax.block_until_ready(
        jax.jit(lambda xx, *p: axiom_evolver(xx, *p, precision=hi))(x, *params))
    ref_hi = reference(x, *params, precision=hi)
    assert jnp.allclose(out_hi, ref_hi, atol=1e-4, rtol=1e-4), (out_hi, ref_hi)

    print("KERNEL_OK")
</pallas_src>

<mosaic_0001>
module attributes {stable_mosaic.version = 11 : i64} {
  func.func @axiom_evolver_kernel(%arg0: i32, %arg1: memref<2x128xf32, #tpu.memory_space<vmem>>, %arg2: memref<16x2xf32, #tpu.memory_space<vmem>>, %arg3: memref<16x1xf32, #tpu.memory_space<vmem>>, %arg4: memref<16x16xf32, #tpu.memory_space<vmem>>, %arg5: memref<16x1xf32, #tpu.memory_space<vmem>>, %arg6: memref<1x16xf32, #tpu.memory_space<vmem>>, %arg7: memref<1x1xf32, #tpu.memory_space<smem>>, %arg8: memref<1x128xf32, #tpu.memory_space<vmem>>) attributes {dimension_semantics = [#tpu.dimension_semantics<parallel>], iteration_bounds = array<i64: 1>, scalar_prefetch = 0 : i64, scratch_operands = 0 : i64, tpu.core_type = #tpu.core_type<tc>, window_params = [{transform_indices = @transform_0, window_bounds = array<i64: 2, 128>}, {pipeline_mode = #tpu.pipeline_mode<synchronous>, transform_indices = @transform_1, window_bounds = array<i64: 16, 2>}, {pipeline_mode = #tpu.pipeline_mode<synchronous>, transform_indices = @transform_2, window_bounds = array<i64: 16, 1>}, {pipeline_mode = #tpu.pipeline_mode<synchronous>, transform_indices = @transform_3, window_bounds = array<i64: 16, 16>}, {pipeline_mode = #tpu.pipeline_mode<synchronous>, transform_indices = @transform_4, window_bounds = array<i64: 16, 1>}, {pipeline_mode = #tpu.pipeline_mode<synchronous>, transform_indices = @transform_5, window_bounds = array<i64: 1, 16>}, {transform_indices = @transform_6, window_bounds = array<i64: 1, 1>}, {transform_indices = @transform_7, window_bounds = array<i64: 1, 128>}]} {
    %c0 = arith.constant 0 : index
    %c0_0 = arith.constant 0 : index
    %0 = vector.load %arg1[%c0, %c0_0] : memref<2x128xf32, #tpu.memory_space<vmem>>, vector<2x128xf32>
    %c0_1 = arith.constant 0 : index
    %c0_2 = arith.constant 0 : index
    %1 = vector.load %arg2[%c0_1, %c0_2] : memref<16x2xf32, #tpu.memory_space<vmem>>, vector<16x2xf32>
    %cst = arith.constant dense<0.000000e+00> : vector<16x128xf32>
    %2 = tpu.matmul %1, %0, %cst {dimension_numbers = #tpu.dot_dimension_numbers<[1], [0], [0], [1], [0, 0, 1, 1], [], []>} : vector<16x2xf32>, vector<2x128xf32>, vector<16x128xf32> -> vector<16x128xf32>
    %c0_3 = arith.constant 0 : index
    %c0_4 = arith.constant 0 : index
    %3 = vector.load %arg3[%c0_3, %c0_4] : memref<16x1xf32, #tpu.memory_space<vmem>>, vector<16x1xf32>
    %4 = vector.broadcast %3 : vector<16x1xf32> to vector<16x128xf32>
    %5 = arith.addf %2, %4 : vector<16x128xf32>
    %6 = math.tanh %5 : vector<16x128xf32>
    %c0_5 = arith.constant 0 : index
    %c0_6 = arith.constant 0 : index
    %7 = vector.load %arg4[%c0_5, %c0_6] : memref<16x16xf32, #tpu.memory_space<vmem>>, vector<16x16xf32>
    %cst_7 = arith.constant dense<0.000000e+00> : vector<16x128xf32>
    %8 = tpu.matmul %7, %6, %cst_7 {dimension_numbers = #tpu.dot_dimension_numbers<[1], [0], [0], [1], [0, 0, 1, 1], [], []>} : vector<16x16xf32>, vector<16x128xf32>, vector<16x128xf32> -> vector<16x128xf32>
    %c0_8 = arith.constant 0 : index
    %c0_9 = arith.constant 0 : index
    %9 = vector.load %arg5[%c0_8, %c0_9] : memref<16x1xf32, #tpu.memory_space<vmem>>, vector<16x1xf32>
    %10 = vector.broadcast %9 : vector<16x1xf32> to vector<16x128xf32>
    %11 = arith.addf %8, %10 : vector<16x128xf32>
    %12 = math.sin %11 : vector<16x128xf32>
    %c0_10 = arith.constant 0 : index
    %c0_11 = arith.constant 0 : index
    %13 = vector.load %arg6[%c0_10, %c0_11] : memref<1x16xf32, #tpu.memory_space<vmem>>, vector<1x16xf32>
    %cst_12 = arith.constant dense<0.000000e+00> : vector<1x128xf32>
    %14 = tpu.matmul %13, %12, %cst_12 {dimension_numbers = #tpu.dot_dimension_numbers<[1], [0], [0], [1], [0, 0, 1, 1], [], []>} : vector<1x16xf32>, vector<16x128xf32>, vector<1x128xf32> -> vector<1x128xf32>
    %c0_13 = arith.constant 0 : index
    %c0_14 = arith.constant 0 : index
    %15 = memref.load %arg7[%c0_13, %c0_14] : memref<1x1xf32, #tpu.memory_space<smem>>
    %16 = vector.broadcast %15 : f32 to vector<1x128xf32>
    %17 = arith.addf %14, %16 : vector<1x128xf32>
    %cst_15 = arith.constant 5.000000e-01 : f32
    %18 = vector.broadcast %cst_15 : f32 to vector<1x128xf32>
    %19 = arith.mulf %18, %17 : vector<1x128xf32>
    %20 = math.tanh %19 : vector<1x128xf32>
    %cst_16 = arith.constant 1.000000e+00 : f32
    %21 = vector.broadcast %cst_16 : f32 to vector<1x128xf32>
    %22 = arith.addf %21, %20 : vector<1x128xf32>
    %c0_17 = arith.constant 0 : index
    %c0_18 = arith.constant 0 : index
    %23 = vector.load %arg8[%c0_17, %c0_18] : memref<1x128xf32, #tpu.memory_space<vmem>>, vector<1x128xf32>
    tpu.vector_store %arg8[%c0_17, %c0_18], %22 {strides = array<i32>} : memref<1x128xf32, #tpu.memory_space<vmem>>, vector<1x128xf32>,
    return
  }
  func.func @transform_0(%arg0: i32) -> (i32, i32) {
    %c0_i32 = arith.constant 0 : i32
    %c0_i32_0 = arith.constant 0 : i32
    return %c0_i32, %arg0 : i32, i32
  }
  func.func @transform_1(%arg0: i32) -> (i32, i32) {
    %c0_i32 = arith.constant 0 : i32
    %c0_i32_0 = arith.constant 0 : i32
    %c0_i32_1 = arith.constant 0 : i32
    return %c0_i32, %c0_i32_0 : i32, i32
  }
  func.func @transform_2(%arg0: i32) -> (i32, i32) {
    %c0_i32 = arith.constant 0 : i32
    %c0_i32_0 = arith.constant 0 : i32
    %c0_i32_1 = arith.constant 0 : i32
    return %c0_i32, %c0_i32_0 : i32, i32
  }
  func.func @transform_3(%arg0: i32) -> (i32, i32) {
    %c0_i32 = arith.constant 0 : i32
    %c0_i32_0 = arith.constant 0 : i32
    %c0_i32_1 = arith.constant 0 : i32
    return %c0_i32, %c0_i32_0 : i32, i32
  }
  func.func @transform_4(%arg0: i32) -> (i32, i32) {
    %c0_i32 = arith.constant 0 : i32
    %c0_i32_0 = arith.constant 0 : i32
    %c0_i32_1 = arith.constant 0 : i32
    return %c0_i32, %c0_i32_0 : i32, i32
  }
  func.func @transform_5(%arg0: i32) -> (i32, i32) {
    %c0_i32 = arith.constant 0 : i32
    %c0_i32_0 = arith.constant 0 : i32
    %c0_i32_1 = arith.constant 0 : i32
    return %c0_i32, %c0_i32_0 : i32, i32
  }
  func.func @transform_6(%arg0: i32) -> (i32, i32) {
    %c0_i32 = arith.constant 0 : i32
    %c0_i32_0 = arith.constant 0 : i32
    %c0_i32_1 = arith.constant 0 : i32
    return %c0_i32, %c0_i32_0 : i32, i32
  }
  func.func @transform_7(%arg0: i32) -> (i32, i32) {
    %c0_i32 = arith.constant 0 : i32
    %c0_i32_0 = arith.constant 0 : i32
    return %c0_i32, %arg0 : i32, i32
  }
}

</mosaic_0001>

<llo_original>
// kernel: axiom_evolver.1
$region0: #{axiom_evolver.1}
  #allocation0 [shape = 'u32[]', space=smem, size = 0x4, offset = 0x4, fixed_abs, tag = 'smem constant byte address 0x4 - core index']
  #allocation1 [shape = 'u32[144,128]{1,0:T(1,128)}', space=vmem, size = 0x12000, scoped, tag = 'internal scratch']
  #allocation2 [shape = 'f32[1,1]{1,0:T(1,128)S(6)}', space=smem, size = 0x200, scoped, tag = 'scoped memory for axiom_evolver.1']
  %s0 = inlined_call_operand.vmem [shape: f32[2,128], index: 0, kind: input, shape index: {}]
  %s1 = inlined_call_operand.vmem [shape: f32[16,2], index: 1, kind: input, shape index: {}]
  %s2 = inlined_call_operand.vmem [shape: f32[16,1], index: 2, kind: input, shape index: {}]
  %s3 = inlined_call_operand.vmem [shape: f32[16,16], index: 3, kind: input, shape index: {}]
  %s4 = inlined_call_operand.vmem [shape: f32[16,1], index: 4, kind: input, shape index: {}]
  %s5 = inlined_call_operand.vmem [shape: f32[1,16], index: 5, kind: input, shape index: {}]
  %s6 = inlined_call_operand.<no memory space> [shape: f32[1,1], index: 6, kind: input, shape index: {}]
  %s7 = inlined_call_operand.vmem [shape: f32[1,128], index: 7, kind: output, shape index: {}]
  %s8 = sld [smem:[#allocation0]]
  $region38: #{axiom_evolver.1} parent=0
    _
  %s10 = ssub.s32 1, %s8
  %s11 = scalar_select 0, %s10, %s8
  %12 = sst [smem:[#allocation2]] %s6
  // Predicated region
  $region2: #{axiom_evolver.1} parent=0 // pred_check
    _
  $region3: #{axiom_evolver.1} parent=0 // pred_check_branch
    %14 = sbr.rel (0) target = $region5
  $region4: #{axiom_evolver.1} parent=0 // pred_region
    _
  $region5: #{axiom_evolver.1} parent=0 // pred_fallthru
    _
  // Predicated region
  $region6: #{axiom_evolver.1} parent=0 // pred_check
    _
  $region7: #{axiom_evolver.1} parent=0 // pred_check_branch
    %16 = sbr.rel (0) target = $region9
  $region8: #{axiom_evolver.1} parent=0 // pred_region
    _
  $region9: #{axiom_evolver.1} parent=0 // pred_fallthru
    _
  // Predicated region
  $region10: #{axiom_evolver.1} parent=0 // pred_check
    _
  $region11: #{axiom_evolver.1} parent=0 // pred_check_branch
    %18 = sbr.rel (0) target = $region13
  $region12: #{axiom_evolver.1} parent=0 // pred_region
    _
  $region13: #{axiom_evolver.1} parent=0 // pred_fallthru
    _
  // Predicated region
  $region14: #{axiom_evolver.1} parent=0 // pred_check
    _
  $region15: #{axiom_evolver.1} parent=0 // pred_check_branch
    %20 = sbr.rel (0) target = $region17
  $region16: #{axiom_evolver.1} parent=0 // pred_region
    _
  $region17: #{axiom_evolver.1} parent=0 // pred_fallthru
    _
  // Predicated region
  $region18: #{axiom_evolver.1} parent=0 // pred_check
    _
  $region19: #{axiom_evolver.1} parent=0 // pred_check_branch
    %22 = sbr.rel (0) target = $region21
  $region20: #{axiom_evolver.1} parent=0 // pred_region
    _
  $region21: #{axiom_evolver.1} parent=0 // pred_fallthru
    _
  // Predicated region
  $region22: #{axiom_evolver.1} parent=0 // pred_check
    _
  $region23: #{axiom_evolver.1} parent=0 // pred_check_branch
    %24 = sbr.rel (0) target = $region25
  $region24: #{axiom_evolver.1} parent=0 // pred_region
    _
  $region25: #{axiom_evolver.1} parent=0 // pred_fallthru
    _
  // Predicated region
  $region26: #{axiom_evolver.1} parent=0 // pred_check
    _
  $region27: #{axiom_evolver.1} parent=0 // pred_check_branch
    %26 = sbr.rel (0) target = $region29
  $region28: #{axiom_evolver.1} parent=0 // pred_region
    _
  $region29: #{axiom_evolver.1} parent=0 // pred_fallthru
    _
  %v27 = vld [vmem:[%s0] sm:$0x3]
  %v28 = vld [vmem:[%s1] sm:$0xff]
  %v29 = vld [vmem:[%s1 + $0x8] sm:$0xff]
  %v30 = vld [vmem:[%s2] sm:$0xff]
  %v31 = vld [vmem:[%s2 + $0x8] sm:$0xff]
  %33 = vset.pattern.permute.xlu0 0
  %34 = vperm.xlu0 %33, %v30
  %v35 = vpop.permute.xlu0 %34
  %38 = vset.pattern.permute.xlu0 0
  %39 = vperm.xlu0 %38, %v31
  %v40 = vpop.permute.xlu0 %39
  %vm42 = vcmask 15360
  %v44 = vsel %vm42, %v28, 0
  %v47 = vsel %vm42, %v29, 0
  %vm49 = vcmask 1041408
  %v51 = vsel %vm49, %v27, 0
  %53 = vmatprep.subr.mxu0 0.0
  %54 = vmatpush1.msra.mxu0 %v51
  %55 = vmatprep.subr.mxu0 0.0
  %56 = vmatpush1.msra.mxu0 0.0
  %57 = vmatprep.subr.mxu0 0.0
  %58 = vmatpush1.msra.mxu0 0.0
  %59 = vmatprep.subr.mxu0 0.0
  %60 = vmatpush1.msra.mxu0 0.0
  %61 = vmatprep.subr.mxu0 0.0
  %62 = vmatpush1.msra.mxu0 0.0
  %63 = vmatprep.subr.mxu0 0.0
  %64 = vmatpush1.msra.mxu0 0.0
  %65 = vmatprep.subr.mxu0 0.0
  %66 = vmatpush1.msra.mxu0 0.0
  %67 = vmatprep.subr.mxu0 0.0
  %68 = vmatpush1.msra.mxu0 0.0
  %69 = vmatprep.subr.mxu0 0.0
  %70 = vmatpush1.msra.mxu0 0.0
  %71 = vmatprep.subr.mxu0 0.0
  %72 = vmatpush1.msra.mxu0 0.0
  %73 = vmatprep.subr.mxu0 0.0
  %74 = vmatpush1.msra.mxu0 0.0
  %75 = vmatprep.subr.mxu0 0.0
  %76 = vmatpush1.msra.mxu0 0.0
  %77 = vmatprep.subr.mxu0 0.0
  %78 = vmatpush1.msra.mxu0 0.0
  %79 = vmatprep.subr.mxu0 0.0
  %80 = vmatpush1.msra.mxu0 0.0
  %81 = vmatprep.subr.mxu0 0.0
  %82 = vmatpush1.msra.mxu0 0.0
  %83 = vmatprep.subr.mxu0 0.0
  %84 = vmatpush1.msra.mxu0 0.0
  %85 = vmatprep.subr.mxu0 0.0
  %86 = vmatpush1.msra.mxu0 0.0
  %87 = vmatprep.subr.mxu0 0.0
  %88 = vmatpush1.msra.mxu0 0.0
  %89 = vmatprep.subr.mxu0 0.0
  %90 = vmatpush1.msra.mxu0 0.0
  %91 = vmatprep.subr.mxu0 0.0
  %92 = vmatpush1.msra.mxu0 0.0
  %93 = vmatprep.subr.mxu0 0.0
  %94 = vmatpush1.msra.mxu0 0.0
  %95 = vmatprep.subr.mxu0 0.0
  %96 = vmatpush1.msra.mxu0 0.0
  %97 = vmatprep.subr.mxu0 0.0
  %98 = vmatpush1.msra.mxu0 0.0
  %99 = vmatprep.subr.mxu0 0.0
  %100 = vmatpush1.msra.mxu0 0.0
  %101 = vmatprep.subr.mxu0 0.0
  %102 = vmatpush1.msra.mxu0 0.0
  %103 = vmatprep.subr.mxu0 0.0
  %104 = vmatpush1.msra.mxu0 0.0
  %105 = vmatprep.subr.mxu0 0.0
  %106 = vmatpush1.msra.mxu0 0.0
  %107 = vmatprep.subr.mxu0 0.0
  %108 = vmatpush1.msra.mxu0 0.0
  %109 = vmatprep.subr.mxu0 0.0
  %110 = vmatpush1.msra.mxu0 0.0
  %111 = vmatprep.subr.mxu0 0.0
  %112 = vmatpush1.msra.mxu0 0.0
  %113 = vmatprep.subr.mxu0 0.0
  %114 = vmatpush1.msra.mxu0 0.0
  %115 = vmatprep.subr.mxu0 0.0
  %116 = vmatpush1.msra.mxu0 0.0
  %117 = vmatprep.mubr.f32.mxu0 0.0
  %118 = vmatmul.mubr.f32.gmra.mrb[0].mxu0 %v44
  %v119 = vpop.f32.mrb[0].mxu0
  %v120 = vadd.f32 %v35, %v119
  %v121 = vpop.f32.mrb[0].mxu0
  %122 = vmatprep.mubr.f32.mxu0 0.0
  %123 = vmatmul.mubr.f32.gmra.mrb[0].mxu0 %v47
  %v124 = vpop.f32.mrb[0].mxu0
  %v125 = vadd.f32 %v40, %v124
  %v126 = vpop.f32.mrb[0].mxu0
  %127 = vdwg.mxu0
  %v128 = vtanh.pop %v120
  %v129 = vtanh.pop %v125
  %v130 = vld [vmem:[%s3] sm:$0xff]
  %v131 = vld [vmem:[%s3 + $0x8] sm:$0xff]
  %v132 = vld [vmem:[%s4] sm:$0xff]
  %v133 = vld [vmem:[%s4 + $0x8] sm:$0xff]
  %135 = vset.pattern.permute.xlu0 0
  %136 = vperm.xlu0 %135, %v132
  %v137 = vpop.permute.xlu0 %136
  %140 = vset.pattern.permute.xlu0 0
  %141 = vperm.xlu0 %140, %v133
  %v142 = vpop.permute.xlu0 %141
  %vm144 = vcmask 130048
  %v146 = vsel %vm144, %v130, 0
  %v149 = vsel %vm144, %v131, 0
  %151 = vmatprep.subr.mxu0 0.0
  %152 = vmatpush1.msra.mxu0 %v128
  %153 = vmatprep.subr.mxu0 0.0
  %154 = vmatpush1.msra.mxu0 %v129
  %155 = vmatprep.subr.mxu0 0.0
  %156 = vmatpush1.msra.mxu0 0.0
  %157 = vmatprep.subr.mxu0 0.0
  %158 = vmatpush1.msra.mxu0 0.0
  %159 = vmatprep.subr.mxu0 0.0
  %160 = vmatpush1.msra.mxu0 0.0
  %161 = vmatprep.subr.mxu0 0.0
  %162 = vmatpush1.msra.mxu0 0.0
  %163 = vmatprep.subr.mxu0 0.0
  %164 = vmatpush1.msra.mxu0 0.0
  %165 = vmatprep.subr.mxu0 0.0
  %166 = vmatpush1.msra.mxu0 0.0
  %167 = vmatprep.subr.mxu0 0.0
  %168 = vmatpush1.msra.mxu0 0.0
  %169 = vmatprep.subr.mxu0 0.0
  %170 = vmatpush1.msra.mxu0 0.0
  %171 = vmatprep.subr.mxu0 0.0
  %172 = vmatpush1.msra.mxu0 0.0
  %173 = vmatprep.subr.mxu0 0.0
  %174 = vmatpush1.msra.mxu0 0.0
  %175 = vmatprep.subr.mxu0 0.0
  %176 = vmatpush1.msra.mxu0 0.0
  %177 = vmatprep.subr.mxu0 0.0
  %178 = vmatpush1.msra.mxu0 0.0
  %179 = vmatprep.subr.mxu0 0.0
  %180 = vmatpush1.msra.mxu0 0.0
  %181 = vmatprep.subr.mxu0 0.0
  %182 = vmatpush1.msra.mxu0 0.0
  %183 = vmatprep.subr.mxu0 0.0
  %184 = vmatpush1.msra.mxu0 0.0
  %185 = vmatprep.subr.mxu0 0.0
  %186 = vmatpush1.msra.mxu0 0.0
  %187 = vmatprep.subr.mxu0 0.0
  %188 = vmatpush1.msra.mxu0 0.0
  %189 = vmatprep.subr.mxu0 0.0
  %190 = vmatpush1.msra.mxu0 0.0
  %191 = vmatprep.subr.mxu0 0.0
  %192 = vmatpush1.msra.mxu0 0.0
  %193 = vmatprep.subr.mxu0 0.0
  %194 = vmatpush1.msra.mxu0 0.0
  %195 = vmatprep.subr.mxu0 0.0
  %196 = vmatpush1.msra.mxu0 0.0
  %197 = vmatprep.subr.mxu0 0.0
  %198 = vmatpush1.msra.mxu0 0.0
  %199 = vmatprep.subr.mxu0 0.0
  %200 = vmatpush1.msra.mxu0 0.0
  %201 = vmatprep.subr.mxu0 0.0
  %202 = vmatpush1.msra.mxu0 0.0
  %203 = vmatprep.subr.mxu0 0.0
  %204 = vmatpush1.msra.mxu0 0.0
  %205 = vmatprep.subr.mxu0 0.0
  %206 = vmatpush1.msra.mxu0 0.0
  %207 = vmatprep.subr.mxu0 0.0
  %208 = vmatpush1.msra.mxu0 0.0
  %209 = vmatprep.subr.mxu0 0.0
  %210 = vmatpush1.msra.mxu0 0.0
  %211 = vmatprep.subr.mxu0 0.0
  %212 = vmatpush1.msra.mxu0 0.0
  %213 = vmatprep.subr.mxu0 0.0
  %214 = vmatpush1.msra.mxu0 0.0
  %215 = vmatprep.mubr.f32.mxu0 0.0
  %216 = vmatmul.mubr.f32.gmra.mrb[0].mxu0 %v146
  %v217 = vpop.f32.mrb[0].mxu0
  %v218 = vadd.f32 %v137, %v217
  %v219 = vpop.f32.mrb[0].mxu0
  %220 = vmatprep.mubr.f32.mxu0 0.0
  %221 = vmatmul.mubr.f32.gmra.mrb[0].mxu0 %v149
  %v222 = vpop.f32.mrb[0].mxu0
  %v223 = vadd.f32 %v142, %v222
  %v224 = vpop.f32.mrb[0].mxu0
  %225 = vdwg.mxu0
  %v226 = vand.u32 2147483647, %v218
  %vm227 = vcmp.le.f32.partialorder %v226, 0.7853982
  %vm228 = vcmp.lt.s32.totalorder %v218, 0
  %v229 = vand.u32 %v218, 2139095040
  %v230 = vshrl.u32 %v229, 23
  %v231 = vsub.s32 %v230, 127
  %v232 = vand.u32 2147483647, %v218
  %v233 = vand.u32 %v232, 8388607
  %v234 = vor.u32 %v233, 8388608
  %v235 = vsub.s32 0, %v234
  %v236 = vadd.s32 %v231, 1
  %vm237 = vcmp.gt.s32.totalorder %v236, 0
  %v238 = vsel %vm237, %v236, 0
  %v239 = vshrl.u32 %v238, 5
  %v240 = vand.u32 %v238, 31
  %v241 = vsub.s32 32, %v240
  %v242 = vshrl.u32 683565275, %v241
  %v243 = vshll.u32 683565275, %v240
  %v244 = vshrl.u32 2475754826, %v241
  %v245 = vor.u32 %v243, %v244
  %v246 = vshll.u32 2475754826, %v240
  %v247 = vshrl.u32 2131351028, %v241
  %v248 = vor.u32 %v246, %v247
  %v249 = vshll.u32 2131351028, %v240
  %v250 = vshrl.u32 2102212464, %v241
  %v251 = vor.u32 %v249, %v250
  %v252 = vshll.u32 2102212464, %v240
  %v253 = vshrl.u32 920167782, %v241
  %v254 = vor.u32 %v252, %v253
  %v255 = vshll.u32 920167782, %v240
  %v256 = vshrl.u32 1326507024, %v241
  %v257 = vor.u32 %v255, %v256
  %vm258 = vcmp.lt.s32.totalorder %v239, 1
  %vm259 = vcmp.lt.s32.totalorder %v239, 2
  %vm260 = vcmp.lt.s32.totalorder %v239, 3
  %vm261 = vcmp.lt.s32.totalorder %v239, 4
  %v262 = vsel %vm258, %v242, %v245
  %v263 = vsel %vm261, %v251, 2102212464
  %v264 = vsel %vm260, %v248, %v263
  %v265 = vsel %vm259, %v262, %v264
  %v266 = vsel %vm258, %v245, %v248
  %v267 = vsel %vm261, %v254, 920167782
  %v268 = vsel %vm260, %v251, %v267
  %v269 = vsel %vm259, %v266, %v268
  %v270 = vsel %vm258, %v248, %v251
  %v271 = vsel %vm261, %v257, 1326507024
  %v272 = vsel %vm260, %v254, %v271
  %v273 = vsel %vm259, %v270, %v272
  %v274 = vshll.u32 %v234, 8
  %v275 = vmul.u32.u64.compose %v274, %v273
  %v276 = vextract.low.u32 %v275
  %v277 = vextract.high.u32 %v275
  %v278 = vmul.u32.u64.compose %v274, %v269
  %v279 = vextract.low.u32 %v278
  %v280 = vextract.high.u32 %v278
  %v281 = vmul.u32 %v274, %v265
  %v282 = vadd.s32 %v277, %v279
  %vm283 = vc.u32 %v277, %v279
  %v284 = vadd.s32 %v280, 1
  %v285 = vsel %vm283, %v284, %v280
  %v286 = vadd.s32 %v281, %v285
  %v287 = vadd.s32 %v286, 536870912
  %v288 = vshrl.u32 %v287, 30
  %v289 = vshll.u32 %v288, 30
  %v290 = vsub.s32 %v286, %v289
  %vm291 = vcmp.lt.s32.totalorder %v290, 0
  %v292 = vsub.s32 0, %v290
  %v293 = vsel %vm291, %v292, %v290
  %v294 = vclz %v293
  %v295 = vsub.s32 %v294, 2
  %vm296 = vcmp.gt.s32.totalorder 0, %v295
  %v297 = vsel %vm296, 0, %v295
  %v298 = vsub.s32 32, %v297
  %v299 = vshll.u32 %v290, %v297
  %v300 = vshrl.u32 %v282, %v298
  %v301 = vor.u32 %v299, %v300
  %v302 = vsub.s32 4294967266, %v297
  %v303 = vadd.s32 %v302, 127
  %v304 = vshll.u32 %v303, 23
  %v305 = vor.u32 4788187, %v304
  %v306 = vand.u32 2147483647, %v305
  %v308 = vcvt.s32.f32 %v301
  %v309 = vmul.f32 %v308, %v306
  %v310 = vxor.u32 %v309, 2147483648
  %v311 = vsel %vm228, %v310, %v309
  %v312 = vsub.s32 4, %v288
  %v313 = vsel %vm228, %v312, %v288
  %v314 = vsel %vm227, %v218, %v311
  %v315 = vsel %vm227, 0, %v313
  %v316 = vcosq.f32.pop %v314
  %v317 = vsinq.f32.pop %v314
  %vm318 = vweird.f32 %v218
  %v319 = vadd.s32 %v315, 3
  %v320 = vand.u32 %v319, 3
  %vm321 = vcmp.lt.s32.totalorder %v320, 2
  %vm322 = vcmp.eq.s32.totalorder %v320, 0
  %v323 = vxor.u32 %v317, 2147483648
  %v324 = vsel %vm322, %v316, %v323
  %vm325 = vcmp.eq.s32.totalorder %v320, 2
  %v326 = vxor.u32 %v316, 2147483648
  %v327 = vsel %vm325, %v326, %v317
  %v328 = vsel %vm321, %v324, %v327
  %v329 = vsel %vm318, nan, %v328
  %v330 = vand.u32 2147483647, %v223
  %vm331 = vcmp.le.f32.partialorder %v330, 0.7853982
  %vm332 = vcmp.lt.s32.totalorder %v223, 0
  %v333 = vand.u32 %v223, 2139095040
  %v334 = vshrl.u32 %v333, 23
  %v335 = vsub.s32 %v334, 127
  %v336 = vand.u32 2147483647, %v223
  %v337 = vand.u32 %v336, 8388607
  %v338 = vor.u32 %v337, 8388608
  %v339 = vsub.s32 0, %v338
  %v340 = vadd.s32 %v335, 1
  %vm341 = vcmp.gt.s32.totalorder %v340, 0
  %v342 = vsel %vm341, %v340, 0
  %v343 = vshrl.u32 %v342, 5
  %v344 = vand.u32 %v342, 31
  %v345 = vsub.s32 32, %v344
  %v346 = vshrl.u32 683565275, %v345
  %v347 = vshll.u32 683565275, %v344
  %v348 = vshrl.u32 2475754826, %v345
  %v349 = vor.u32 %v347, %v348
  %v350 = vshll.u32 2475754826, %v344
  %v351 = vshrl.u32 2131351028, %v345
  %v352 = vor.u32 %v350, %v351
  %v353 = vshll.u32 2131351028, %v344
  %v354 = vshrl.u32 2102212464, %v345
  %v355 = vor.u32 %v353, %v354
  %v356 = vshll.u32 2102212464, %v344
  %v357 = vshrl.u32 920167782, %v345
  %v358 = vor.u32 %v356, %v357
  %v359 = vshll.u32 920167782, %v344
  %v360 = vshrl.u32 1326507024, %v345
  %v361 = vor.u32 %v359, %v360
  %vm362 = vcmp.lt.s32.totalorder %v343, 1
  %vm363 = vcmp.lt.s32.totalorder %v343, 2
  %vm364 = vcmp.lt.s32.totalorder %v343, 3
  %vm365 = vcmp.lt.s32.totalorder %v343, 4
  %v366 = vsel %vm362, %v346, %v349
  %v367 = vsel %vm365, %v355, 2102212464
  %v368 = vsel %vm364, %v352, %v367
  %v369 = vsel %vm363, %v366, %v368
  %v370 = vsel %vm362, %v349, %v352
  %v371 = vsel %vm365, %v358, 920167782
  %v372 = vsel %vm364, %v355, %v371
  %v373 = vsel %vm363, %v370, %v372
  %v374 = vsel %vm362, %v352, %v355
  %v375 = vsel %vm365, %v361, 1326507024
  %v376 = vsel %vm364, %v358, %v375
  %v377 = vsel %vm363, %v374, %v376
  %v378 = vshll.u32 %v338, 8
  %v379 = vmul.u32.u64.compose %v378, %v377
  %v380 = vextract.low.u32 %v379
  %v381 = vextract.high.u32 %v379
  %v382 = vmul.u32.u64.compose %v378, %v373
  %v383 = vextract.low.u32 %v382
  %v384 = vextract.high.u32 %v382
  %v385 = vmul.u32 %v378, %v369
  %v386 = vadd.s32 %v381, %v383
  %vm387 = vc.u32 %v381, %v383
  %v388 = vadd.s32 %v384, 1
  %v389 = vsel %vm387, %v388, %v384
  %v390 = vadd.s32 %v385, %v389
  %v391 = vadd.s32 %v390, 536870912
  %v392 = vshrl.u32 %v391, 30
  %v393 = vshll.u32 %v392, 30
  %v394 = vsub.s32 %v390, %v393
  %vm395 = vcmp.lt.s32.totalorder %v394, 0
  %v396 = vsub.s32 0, %v394
  %v397 = vsel %vm395, %v396, %v394
  %v398 = vclz %v397
  %v399 = vsub.s32 %v398, 2
  %vm400 = vcmp.gt.s32.totalorder 0, %v399
  %v401 = vsel %vm400, 0, %v399
  %v402 = vsub.s32 32, %v401
  %v403 = vshll.u32 %v394, %v401
  %v404 = vshrl.u32 %v386, %v402
  %v405 = vor.u32 %v403, %v404
  %v406 = vsub.s32 4294967266, %v401
  %v407 = vadd.s32 %v406, 127
  %v408 = vshll.u32 %v407, 23
  %v409 = vor.u32 4788187, %v408
  %v410 = vand.u32 2147483647, %v409
  %v412 = vcvt.s32.f32 %v405
  %v413 = vmul.f32 %v412, %v410
  %v414 = vxor.u32 %v413, 2147483648
  %v415 = vsel %vm332, %v414, %v413
  %v416 = vsub.s32 4, %v392
  %v417 = vsel %vm332, %v416, %v392
  %v418 = vsel %vm331, %v223, %v415
  %v419 = vsel %vm331, 0, %v417
  %v420 = vcosq.f32.pop %v418
  %v421 = vsinq.f32.pop %v418
  %vm422 = vweird.f32 %v223
  %v423 = vadd.s32 %v419, 3
  %v424 = vand.u32 %v423, 3
  %vm425 = vcmp.lt.s32.totalorder %v424, 2
  %vm426 = vcmp.eq.s32.totalorder %v424, 0
  %v427 = vxor.u32 %v421, 2147483648
  %v428 = vsel %vm426, %v420, %v427
  %vm429 = vcmp.eq.s32.totalorder %v424, 2
  %v430 = vxor.u32 %v420, 2147483648
  %v431 = vsel %vm429, %v430, %v421
  %v432 = vsel %vm425, %v428, %v431
  %v433 = vsel %vm422, nan, %v432
  %v434 = vld [vmem:[%s5] sm:$0x1]
  %s435 = sld [smem:[#allocation2]]
  %v436 = vstv %s435
  %v438 = vsel %vm144, %v434, 0
  %440 = vmatprep.subr.mxu0 0.0
  %441 = vmatpush1.msra.mxu0 %v329
  %442 = vmatprep.subr.mxu0 0.0
  %443 = vmatpush1.msra.mxu0 %v433
  %444 = vmatprep.subr.mxu0 0.0
  %445 = vmatpush1.msra.mxu0 0.0
  %446 = vmatprep.subr.mxu0 0.0
  %447 = vmatpush1.msra.mxu0 0.0
  %448 = vmatprep.subr.mxu0 0.0
  %449 = vmatpush1.msra.mxu0 0.0
  %450 = vmatprep.subr.mxu0 0.0
  %451 = vmatpush1.msra.mxu0 0.0
  %452 = vmatprep.subr.mxu0 0.0
  %453 = vmatpush1.msra.mxu0 0.0
  %454 = vmatprep.subr.mxu0 0.0
  %455 = vmatpush1.msra.mxu0 0.0
  %456 = vmatprep.subr.mxu0 0.0
  %457 = vmatpush1.msra.mxu0 0.0
  %458 = vmatprep.subr.mxu0 0.0
  %459 = vmatpush1.msra.mxu0 0.0
  %460 = vmatprep.subr.mxu0 0.0
  %461 = vmatpush1.msra.mxu0 0.0
  %462 = vmatprep.subr.mxu0 0.0
  %463 = vmatpush1.msra.mxu0 0.0
  %464 = vmatprep.subr.mxu0 0.0
  %465 = vmatpush1.msra.mxu0 0.0
  %466 = vmatprep.subr.mxu0 0.0
  %467 = vmatpush1.msra.mxu0 0.0
  %468 = vmatprep.subr.mxu0 0.0
  %469 = vmatpush1.msra.mxu0 0.0
  %470 = vmatprep.subr.mxu0 0.0
  %471 = vmatpush1.msra.mxu0 0.0
  %472 = vmatprep.subr.mxu0 0.0
  %473 = vmatpush1.msra.mxu0 0.0
  %474 = vmatprep.subr.mxu0 0.0
  %475 = vmatpush1.msra.mxu0 0.0
  %476 = vmatprep.subr.mxu0 0.0
  %477 = vmatpush1.msra.mxu0 0.0
  %478 = vmatprep.subr.mxu0 0.0
  %479 = vmatpush1.msra.mxu0 0.0
  %480 = vmatprep.subr.mxu0 0.0
  %481 = vmatpush1.msra.mxu0 0.0
  %482 = vmatprep.subr.mxu0 0.0
  %483 = vmatpush1.msra.mxu0 0.0
  %484 = vmatprep.subr.mxu0 0.0
  %485 = vmatpush1.msra.mxu0 0.0
  %486 = vmatprep.subr.mxu0 0.0
  %487 = vmatpush1.msra.mxu0 0.0
  %488 = vmatprep.subr.mxu0 0.0
  %489 = vmatpush1.msra.mxu0 0.0
  %490 = vmatprep.subr.mxu0 0.0
  %491 = vmatpush1.msra.mxu0 0.0
  %492 = vmatprep.subr.mxu0 0.0
  %493 = vmatpush1.msra.mxu0 0.0
  %494 = vmatprep.subr.mxu0 0.0
  %495 = vmatpush1.msra.mxu0 0.0
  %496 = vmatprep.subr.mxu0 0.0
  %497 = vmatpush1.msra.mxu0 0.0
  %498 = vmatprep.subr.mxu0 0.0
  %499 = vmatpush1.msra.mxu0 0.0
  %500 = vmatprep.subr.mxu0 0.0
  %501 = vmatpush1.msra.mxu0 0.0
  %502 = vmatprep.subr.mxu0 0.0
  %503 = vmatpush1.msra.mxu0 0.0
  %504 = vmatprep.mubr.f32.mxu0 0.0
  %505 = vmatmul.mubr.f32.gmra.mrb[0].mxu0 %v438
  %v506 = vpop.f32.mrb[0].mxu0
  %v507 = vadd.f32 %v436, %v506
  %v508 = vpop.f32.mrb[0].mxu0
  %509 = vdwg.mxu0
  %v510 = vmul.f32 %v507, 0.5
  %v511 = vtanh.pop %v510
  %v512 = vadd.f32 %v511, 1.0
  %513 = vst [vmem:[%s7] sm:$0x1] %v512
  // Predicated region
  $region30: #{axiom_evolver.1} parent=0 // pred_check
    _
  $region31: #{axiom_evolver.1} parent=0 // pred_check_branch
    %515 = sbr.rel (0) target = $region33
  $region32: #{axiom_evolver.1} parent=0 // pred_region
    _
  $region33: #{axiom_evolver.1} parent=0 // pred_fallthru
    _
  // Predicated region
  $region34: #{axiom_evolver.1} parent=0 // pred_check
    _
  $region35: #{axiom_evolver.1} parent=0 // pred_check_branch
    %517 = sbr.rel (0) target = $region37
  $region36: #{axiom_evolver.1} parent=0 // pred_region
    _
  $region37: #{axiom_evolver.1} parent=0 // pred_fallthru
    _

</llo_original>
